<compile_context>
chip_gen: v7x
topology: tpu7x:2x2x1
jax: 0.10.0
libtpu: 0.0.40
codegen_flags: <defaults>
</compile_context>

<pallas_src>
import jax
import jax.numpy as jnp
from jax import lax
from jax.experimental import pallas as pl
from jax.experimental.pallas import tpu as pltpu

STATE_RAW = 6        # [pred1_x, pred1_y, pred2_x, pred2_y, prey_x, prey_y]
STATE_SIZE = 4       # fc1 input dim implied by [closer_pred_xy, prey_xy]
HIDDEN = 32
ACTION_SIZE = 4      # synthetic choice for the example
LANES = 128          # lane width for hidden activations / packed weights
FC1_IN = 8           # fc1 contraction dim (4 real features, padded to one sublane group)
OUT_LANES = 8        # output block lane width (ACTION_SIZE real lanes, rest zero)
TILE_B = 2048        # batch tile; only needs to be a multiple of 8


# ----------------------------- Pallas kernel --------------------------------
def qnet_kernel(s_ref, w1_ref, w23_ref, b_ref, o_ref):
    # s_ref:   (TB, 6)        raw state, f32
    # w1_ref:  (8, 128)       bf16, rows 0..3 = W1 (4x32), rest zero
    # w23_ref: (2, 128, 128)  bf16, [0]=W2 (32x32 padded), [1]=W3 (32x4 padded), (in, out)
    # b_ref:   (8, 128)       f32, rows 0..2 = b1, b2, b3 (zero padded)
    # o_ref:   (TB, 8)        f32, lanes 0..ACTION_SIZE-1 valid
    tb = s_ref.shape[0]

    # ---- fused preprocessing (mirrors `int(s)` truncation + closer-predator select) ----
    s = s_ref[...].astype(jnp.int32).astype(jnp.float32)        # trunc toward zero, like int()
    p1x, p1y = s[:, 0:1], s[:, 1:2]
    p2x, p2y = s[:, 2:3], s[:, 3:4]
    prx, pry = s[:, 4:5], s[:, 5:6]
    d1 = (p1x - prx) ** 2 + (p1y - pry) ** 2                    # squared dist (monotone in ||.||)
    d2 = (p2x - prx) ** 2 + (p2y - pry) ** 2
    take1 = d1 <= d2                                            # np.argmin tie-break -> predator 1
    cx = jnp.where(take1, p1x, p2x)
    cy = jnp.where(take1, p1y, p2y)

    # Narrow fc1 input: lane0=closer_x, lane1=closer_y, lane2=prey_x, lane3=prey_y, 4..7 zero.
    lane = lax.broadcasted_iota(jnp.int32, (tb, FC1_IN), 1)
    x = jnp.where(lane == 0, cx,
        jnp.where(lane == 1, cy,
        jnp.where(lane == 2, prx,
        jnp.where(lane == 3, pry, 0.0))))                       # (TB, 8) f32

    # ---- MLP: fc1 -> relu -> fc2 -> relu -> fc3 (bf16 operands, f32 accumulation) ----
    h = jnp.dot(x.astype(jnp.bfloat16), w1_ref[...],
                preferred_element_type=jnp.float32) + b_ref[0:1, :]
    h = jnp.maximum(h, 0.0).astype(jnp.bfloat16)
    h = jnp.dot(h, w23_ref[0], preferred_element_type=jnp.float32) + b_ref[1:2, :]
    h = jnp.maximum(h, 0.0).astype(jnp.bfloat16)
    o = jnp.dot(h, w23_ref[1], preferred_element_type=jnp.float32) + b_ref[2:3, :]
    o_ref[...] = o[:, :OUT_LANES].astype(o_ref.dtype)


# ------------------------------ wrapper --------------------------------------
def qnet_forward_pallas(state, w1_pad, w23_slab, b_slab, *, tile_b=TILE_B):
    """state: (B, 6) raw states; returns (B, ACTION_SIZE) Q-values."""
    b = state.shape[0]
    tb = min(tile_b, ((b + 7) // 8) * 8)       # multiple of 8; don't over-tile tiny batches
    nb = pl.cdiv(b, tb)
    bp = nb * tb
    state = state.astype(jnp.float32)
    if bp != b:                                # pad only the batch dim (rows sliced off below)
        state = jnp.pad(state, ((0, bp - b), (0, 0)))

    out = pl.pallas_call(
        qnet_kernel,
        out_shape=jax.ShapeDtypeStruct((bp, OUT_LANES), jnp.float32),
        grid=(nb,),
        in_specs=[
            pl.BlockSpec((tb, STATE_RAW), lambda i: (i, 0)),           # per-tile raw state
            pl.BlockSpec((FC1_IN, LANES), lambda i: (0, 0)),           # W1: VMEM-resident
            pl.BlockSpec((2, LANES, LANES), lambda i: (0, 0, 0)),      # W2,W3: VMEM-resident
            pl.BlockSpec((8, LANES), lambda i: (0, 0)),                # biases: VMEM-resident
        ],
        out_specs=pl.BlockSpec((tb, OUT_LANES), lambda i: (i, 0)),     # narrow output block
        compiler_params=pltpu.CompilerParams(
            dimension_semantics=("parallel",)),                        # shard batch tiles on v7x
    )(state, w1_pad, w23_slab, b_slab)
    return out[:b, :ACTION_SIZE]


@jax.jit
def qnetwork_forward(state, w1_pad, w23_slab, b_slab):
    return qnet_forward_pallas(state, w1_pad, w23_slab, b_slab)


# --------------------------- params & packing --------------------------------
def init_params(key):
    """nn.Linear-style init. Weights stored as (in, out); biases as (1, out)."""
    def linear(k, fan_in, fan_out):
        kw, kb = jax.random.split(k)
        bound = 1.0 / jnp.sqrt(fan_in)
        w = jax.random.uniform(kw, (fan_in, fan_out), jnp.float32, -bound, bound)
        b = jax.random.uniform(kb, (1, fan_out), jnp.float32, -bound, bound)
        return w, b

    k1, k2, k3 = jax.random.split(key, 3)
    w1, b1 = linear(k1, STATE_SIZE, HIDDEN)
    w2, b2 = linear(k2, HIDDEN, HIDDEN)
    w3, b3 = linear(k3, HIDDEN, ACTION_SIZE)
    return dict(w1=w1, b1=b1, w2=w2, b2=b2, w3=w3, b3=b3)


def pack_params(params):
    """Zero-pad layers into bf16 MXU operands and one f32 bias slab (done once)."""
    w1_pad = jnp.zeros((FC1_IN, LANES), jnp.float32)
    w1_pad = w1_pad.at[:STATE_SIZE, :HIDDEN].set(params["w1"])
    w23 = jnp.zeros((2, LANES, LANES), jnp.float32)
    w23 = w23.at[0, :HIDDEN, :HIDDEN].set(params["w2"])
    w23 = w23.at[1, :HIDDEN, :ACTION_SIZE].set(params["w3"])
    b_slab = jnp.zeros((8, LANES), jnp.float32)
    b_slab = b_slab.at[0, :HIDDEN].set(params["b1"][0])
    b_slab = b_slab.at[1, :HIDDEN].set(params["b2"][0])
    b_slab = b_slab.at[2, :ACTION_SIZE].set(params["b3"][0])
    return w1_pad.astype(jnp.bfloat16), w23.astype(jnp.bfloat16), b_slab


# ------------------------------ reference ------------------------------------
def reference_forward(state, params):
    """Pure-JAX mirror of the torch forward (batched).  Uses the kernel's bf16
    weight/activation rounding (f32 accumulation) so the tolerance can stay tight;
    vs. the exact f32 torch module the bf16 kernel differs by ~1e-2 relative."""
    bf16 = jnp.bfloat16
    s = state.astype(jnp.float32).astype(jnp.int32).astype(jnp.float32)
    p1, p2, prey = s[:, 0:2], s[:, 2:4], s[:, 4:6]
    d1 = jnp.sum((p1 - prey) ** 2, axis=-1, keepdims=True)
    d2 = jnp.sum((p2 - prey) ** 2, axis=-1, keepdims=True)
    closer = jnp.where(d1 <= d2, p1, p2)
    x = jnp.concatenate([closer, prey], axis=-1).astype(bf16)
    w1 = params["w1"].astype(bf16)
    w2 = params["w2"].astype(bf16)
    w3 = params["w3"].astype(bf16)
    h = jnp.maximum(jnp.dot(x, w1, preferred_element_type=jnp.float32) + params["b1"], 0.0)
    h = jnp.maximum(jnp.dot(h.astype(bf16), w2, preferred_element_type=jnp.float32) + params["b2"], 0.0)
    return jnp.dot(h.astype(bf16), w3, preferred_element_type=jnp.float32) + params["b3"]


# ------------------------------- main ----------------------------------------
if __name__ == "__main__":
    key = jax.random.PRNGKey(0)
    k_params, k_state = jax.random.split(key)

    params = init_params(k_params)
    w1_pad, w23_slab, b_slab = pack_params(params)

    # small batch of states; each row = [pred1_x, pred1_y, pred2_x, pred2_y, prey_x, prey_y]
    B = 8
    state = jax.random.uniform(k_state, (B, STATE_RAW), jnp.float32, 0.0, 16.0)

    out = qnetwork_forward(state, w1_pad, w23_slab, b_slab)
    out = jax.block_until_ready(out)

    ref = reference_forward(state, params)
    assert out.shape == (B, ACTION_SIZE)
    assert jnp.allclose(out, ref, atol=2e-2, rtol=2e-2)

    print("KERNEL_OK")
</pallas_src>

<mosaic_0001>
module attributes {stable_mosaic.version = 11 : i64} {
  func.func @qnet_kernel(%arg0: i32, %arg1: memref<8x6xf32, #tpu.memory_space<vmem>>, %arg2: memref<8x128xbf16, #tpu.memory_space<vmem>>, %arg3: memref<2x128x128xbf16, #tpu.memory_space<vmem>>, %arg4: memref<8x128xf32, #tpu.memory_space<vmem>>, %arg5: memref<8x8xf32, #tpu.memory_space<vmem>>) attributes {dimension_semantics = [#tpu.dimension_semantics<parallel>], iteration_bounds = array<i64: 1>, scalar_prefetch = 0 : i64, scratch_operands = 0 : i64, tpu.core_type = #tpu.core_type<tc>, window_params = [{transform_indices = @transform_0, window_bounds = array<i64: 8, 6>}, {pipeline_mode = #tpu.pipeline_mode<synchronous>, transform_indices = @transform_1, window_bounds = array<i64: 8, 128>}, {pipeline_mode = #tpu.pipeline_mode<synchronous>, transform_indices = @transform_2, window_bounds = array<i64: 2, 128, 128>}, {pipeline_mode = #tpu.pipeline_mode<synchronous>, transform_indices = @transform_3, window_bounds = array<i64: 8, 128>}, {transform_indices = @transform_4, window_bounds = array<i64: 8, 8>}]} {
    %c0 = arith.constant 0 : index
    %c0_0 = arith.constant 0 : index
    %0 = vector.load %arg1[%c0, %c0_0] : memref<8x6xf32, #tpu.memory_space<vmem>>, vector<8x6xf32>
    %1 = arith.fptosi %0 : vector<8x6xf32> to vector<8x6xi32>
    %2 = arith.sitofp %1 : vector<8x6xi32> to vector<8x6xf32>
    %3 = vector.extract_strided_slice %2 {offsets = [0, 0], sizes = [8, 1], strides = [1, 1]} : vector<8x6xf32> to vector<8x1xf32>
    %4 = vector.extract_strided_slice %2 {offsets = [0, 1], sizes = [8, 1], strides = [1, 1]} : vector<8x6xf32> to vector<8x1xf32>
    %5 = vector.extract_strided_slice %2 {offsets = [0, 2], sizes = [8, 1], strides = [1, 1]} : vector<8x6xf32> to vector<8x1xf32>
    %6 = vector.extract_strided_slice %2 {offsets = [0, 3], sizes = [8, 1], strides = [1, 1]} : vector<8x6xf32> to vector<8x1xf32>
    %7 = vector.extract_strided_slice %2 {offsets = [0, 4], sizes = [8, 1], strides = [1, 1]} : vector<8x6xf32> to vector<8x1xf32>
    %8 = vector.extract_strided_slice %2 {offsets = [0, 5], sizes = [8, 1], strides = [1, 1]} : vector<8x6xf32> to vector<8x1xf32>
    %9 = arith.subf %3, %7 : vector<8x1xf32>
    %10 = arith.mulf %9, %9 : vector<8x1xf32>
    %11 = arith.subf %4, %8 : vector<8x1xf32>
    %12 = arith.mulf %11, %11 : vector<8x1xf32>
    %13 = arith.addf %10, %12 : vector<8x1xf32>
    %14 = arith.subf %5, %7 : vector<8x1xf32>
    %15 = arith.mulf %14, %14 : vector<8x1xf32>
    %16 = arith.subf %6, %8 : vector<8x1xf32>
    %17 = arith.mulf %16, %16 : vector<8x1xf32>
    %18 = arith.addf %15, %17 : vector<8x1xf32>
    %19 = arith.cmpf ole, %13, %18 : vector<8x1xf32>
    %20 = arith.select %19, %3, %5 : vector<8x1xi1>, vector<8x1xf32>
    %21 = arith.select %19, %4, %6 : vector<8x1xi1>, vector<8x1xf32>
    %22 = tpu.iota {dimensions = array<i32: 1>} : vector<8x8xi32>
    %c0_i32 = arith.constant 0 : i32
    %23 = vector.broadcast %c0_i32 : i32 to vector<8x8xi32>
    %24 = arith.cmpi eq, %22, %23 : vector<8x8xi32>
    %c1_i32 = arith.constant 1 : i32
    %25 = vector.broadcast %c1_i32 : i32 to vector<8x8xi32>
    %26 = arith.cmpi eq, %22, %25 : vector<8x8xi32>
    %c2_i32 = arith.constant 2 : i32
    %27 = vector.broadcast %c2_i32 : i32 to vector<8x8xi32>
    %28 = arith.cmpi eq, %22, %27 : vector<8x8xi32>
    %c3_i32 = arith.constant 3 : i32
    %29 = vector.broadcast %c3_i32 : i32 to vector<8x8xi32>
    %30 = arith.cmpi eq, %22, %29 : vector<8x8xi32>
    %cst = arith.constant 0.000000e+00 : f32
    %31 = vector.shape_cast %8 : vector<8x1xf32> to vector<8x1xf32>
    %32 = vector.broadcast %31 : vector<8x1xf32> to vector<8x8xf32>
    %33 = vector.broadcast %cst : f32 to vector<8x8xf32>
    %34 = arith.select %30, %32, %33 : vector<8x8xi1>, vector<8x8xf32>
    %35 = vector.shape_cast %7 : vector<8x1xf32> to vector<8x1xf32>
    %36 = vector.broadcast %35 : vector<8x1xf32> to vector<8x8xf32>
    %37 = arith.select %28, %36, %34 : vector<8x8xi1>, vector<8x8xf32>
    %38 = vector.shape_cast %21 : vector<8x1xf32> to vector<8x1xf32>
    %39 = vector.broadcast %38 : vector<8x1xf32> to vector<8x8xf32>
    %40 = arith.select %26, %39, %37 : vector<8x8xi1>, vector<8x8xf32>
    %41 = vector.shape_cast %20 : vector<8x1xf32> to vector<8x1xf32>
    %42 = vector.broadcast %41 : vector<8x1xf32> to vector<8x8xf32>
    %43 = arith.select %24, %42, %40 : vector<8x8xi1>, vector<8x8xf32>
    %44 = arith.truncf %43 : vector<8x8xf32> to vector<8x8xbf16>
    %c0_1 = arith.constant 0 : index
    %c0_2 = arith.constant 0 : index
    %45 = vector.load %arg2[%c0_1, %c0_2] : memref<8x128xbf16, #tpu.memory_space<vmem>>, vector<8x128xbf16>
    %cst_3 = arith.constant dense<0.000000e+00> : vector<8x128xf32>
    %46 = tpu.matmul %44, %45, %cst_3 {dimension_numbers = #tpu.dot_dimension_numbers<[1], [0], [0], [1], [0, 0, 1, 1], [], []>} : vector<8x8xbf16>, vector<8x128xbf16>, vector<8x128xf32> -> vector<8x128xf32>
    %c0_4 = arith.constant 0 : index
    %c0_5 = arith.constant 0 : index
    %47 = vector.load %arg4[%c0_4, %c0_5] : memref<8x128xf32, #tpu.memory_space<vmem>>, vector<1x128xf32>
    %48 = vector.broadcast %47 : vector<1x128xf32> to vector<8x128xf32>
    %49 = arith.addf %46, %48 : vector<8x128xf32>
    %cst_6 = arith.constant 0.000000e+00 : f32
    %50 = vector.broadcast %cst_6 : f32 to vector<8x128xf32>
    %51 = arith.maximumf %49, %50 : vector<8x128xf32>
    %52 = arith.truncf %51 : vector<8x128xf32> to vector<8x128xbf16>
    %c0_7 = arith.constant 0 : index
    %c0_8 = arith.constant 0 : index
    %c0_9 = arith.constant 0 : index
    %53 = vector.load %arg3[%c0_7, %c0_8, %c0_9] : memref<2x128x128xbf16, #tpu.memory_space<vmem>>, vector<1x128x128xbf16>
    %54 = vector.shape_cast %53 : vector<1x128x128xbf16> to vector<128x128xbf16>
    %cst_10 = arith.constant dense<0.000000e+00> : vector<8x128xf32>
    %55 = tpu.matmul %52, %54, %cst_10 {dimension_numbers = #tpu.dot_dimension_numbers<[1], [0], [0], [1], [0, 0, 1, 1], [], []>} : vector<8x128xbf16>, vector<128x128xbf16>, vector<8x128xf32> -> vector<8x128xf32>
    %c1 = arith.constant 1 : index
    %c0_11 = arith.constant 0 : index
    %56 = vector.load %arg4[%c1, %c0_11] : memref<8x128xf32, #tpu.memory_space<vmem>>, vector<1x128xf32>
    %57 = vector.broadcast %56 : vector<1x128xf32> to vector<8x128xf32>
    %58 = arith.addf %55, %57 : vector<8x128xf32>
    %cst_12 = arith.constant 0.000000e+00 : f32
    %59 = vector.broadcast %cst_12 : f32 to vector<8x128xf32>
    %60 = arith.maximumf %58, %59 : vector<8x128xf32>
    %61 = arith.truncf %60 : vector<8x128xf32> to vector<8x128xbf16>
    %c1_13 = arith.constant 1 : index
    %c0_14 = arith.constant 0 : index
    %c0_15 = arith.constant 0 : index
    %62 = vector.load %arg3[%c1_13, %c0_14, %c0_15] : memref<2x128x128xbf16, #tpu.memory_space<vmem>>, vector<1x128x128xbf16>
    %63 = vector.shape_cast %62 : vector<1x128x128xbf16> to vector<128x128xbf16>
    %cst_16 = arith.constant dense<0.000000e+00> : vector<8x128xf32>
    %64 = tpu.matmul %61, %63, %cst_16 {dimension_numbers = #tpu.dot_dimension_numbers<[1], [0], [0], [1], [0, 0, 1, 1], [], []>} : vector<8x128xbf16>, vector<128x128xbf16>, vector<8x128xf32> -> vector<8x128xf32>
    %c2 = arith.constant 2 : index
    %c0_17 = arith.constant 0 : index
    %65 = vector.load %arg4[%c2, %c0_17] : memref<8x128xf32, #tpu.memory_space<vmem>>, vector<1x128xf32>
    %66 = vector.broadcast %65 : vector<1x128xf32> to vector<8x128xf32>
    %67 = arith.addf %64, %66 : vector<8x128xf32>
    %68 = vector.extract_strided_slice %67 {offsets = [0, 0], sizes = [8, 8], strides = [1, 1]} : vector<8x128xf32> to vector<8x8xf32>
    %c0_18 = arith.constant 0 : index
    %c0_19 = arith.constant 0 : index
    %69 = vector.load %arg5[%c0_18, %c0_19] : memref<8x8xf32, #tpu.memory_space<vmem>>, vector<8x8xf32>
    tpu.vector_store %arg5[%c0_18, %c0_19], %68 {strides = array<i32>} : memref<8x8xf32, #tpu.memory_space<vmem>>, vector<8x8xf32>,
    return
  }
  func.func @transform_0(%arg0: i32) -> (i32, i32) {
    %c0_i32 = arith.constant 0 : i32
    %c0_i32_0 = arith.constant 0 : i32
    return %arg0, %c0_i32 : i32, i32
  }
  func.func @transform_1(%arg0: i32) -> (i32, i32) {
    %c0_i32 = arith.constant 0 : i32
    %c0_i32_0 = arith.constant 0 : i32
    %c0_i32_1 = arith.constant 0 : i32
    return %c0_i32, %c0_i32_0 : i32, i32
  }
  func.func @transform_2(%arg0: i32) -> (i32, i32, i32) {
    %c0_i32 = arith.constant 0 : i32
    %c0_i32_0 = arith.constant 0 : i32
    %c0_i32_1 = arith.constant 0 : i32
    %c0_i32_2 = arith.constant 0 : i32
    return %c0_i32, %c0_i32_0, %c0_i32_1 : i32, i32, i32
  }
  func.func @transform_3(%arg0: i32) -> (i32, i32) {
    %c0_i32 = arith.constant 0 : i32
    %c0_i32_0 = arith.constant 0 : i32
    %c0_i32_1 = arith.constant 0 : i32
    return %c0_i32, %c0_i32_0 : i32, i32
  }
  func.func @transform_4(%arg0: i32) -> (i32, i32) {
    %c0_i32 = arith.constant 0 : i32
    %c0_i32_0 = arith.constant 0 : i32
    return %arg0, %c0_i32 : i32, i32
  }
}

</mosaic_0001>

<llo_original>
// kernel: qnetwork_forward.1
$region0: #{qnetwork_forward.1}
  #allocation0 [shape = 'u32[]', space=smem, size = 0x4, offset = 0x4, fixed_abs, tag = 'smem constant byte address 0x4 - core index']
  #allocation1 [shape = 'u32[144,128]{1,0:T(1,128)}', space=vmem, size = 0x12000, scoped, tag = 'internal scratch']
  %s0 = inlined_call_operand.hbm [shape: f32[8,6], index: 0, kind: input, shape index: {}]
  %s1 = inlined_call_operand.hbm [shape: bf16[8,128], index: 1, kind: input, shape index: {}]
  %s2 = inlined_call_operand.hbm [shape: bf16[2,128,128], index: 2, kind: input, shape index: {}]
  %s3 = inlined_call_operand.vmem [shape: f32[8,128], index: 3, kind: input, shape index: {}]
  %s4 = inlined_call_operand.vmem [shape: f32[8,8], index: 4, kind: output, shape index: {}]
  %s5 = sld [smem:[#allocation0]]
  $region38: #{qnetwork_forward.1} parent=0
    _
  %s7 = ssub.s32 1, %s5
  %s8 = scalar_select 0, %s7, %s5
  $region1: #{qnetwork_forward.1} parent=0
    #allocation2 [shape = 'u8[4096]{0}', space=vmem, size = 0x1000, scoped, tag = 'input window, operand 0, single buffered']
    #allocation3 [shape = 's32[1]{0}', space=sflag, size = 0x4, scoped, tag = 'scoped memory for qnetwork_forward.1']
    #allocation4 [shape = 'u8[2048]{0}', space=vmem, size = 0x800, scoped, tag = 'input window, operand 1, single buffered']
    #allocation5 [shape = 's32[1]{0}', space=sflag, size = 0x4, scoped, tag = 'scoped memory for qnetwork_forward.1']
    #allocation6 [shape = 'u8[65536]{0}', space=vmem, size = 0x10000, scoped, tag = 'input window, operand 2, single buffered']
    %9 = vsyncpa [#allocation3], 0
    %10 = vsyncpa [#allocation5], 0
    // Predicated region
    $region2: #{qnetwork_forward.1} parent=1 // pred_check
      _
    $region3: #{qnetwork_forward.1} parent=1 // pred_check_branch
      %12 = sbr.rel (0) target = $region5
    $region4: #{qnetwork_forward.1} parent=1 // pred_region
      %s14 = ssub.s32 128, 128
      %15 = vsyncadd [#allocation3], %s14
      %s17 = sshll.u32 [#allocation2], 4
      %s18 = int_to_ptr.vmem [resolvable:$true] %s17
      %20 = dma.hbm_to_vmem [thread:$0]  %s0, 128, %s18, [#allocation3]
    $region5: #{qnetwork_forward.1} parent=1 // pred_fallthru
      _
    // Predicated region
    $region6: #{qnetwork_forward.1} parent=1 // pred_check
      _
    $region7: #{qnetwork_forward.1} parent=1 // pred_check_branch
      %22 = sbr.rel (0) target = $region9
    $region8: #{qnetwork_forward.1} parent=1 // pred_region
      %s24 = ssub.s32 64, 64
      %25 = vsyncadd [#allocation5], %s24
      %s27 = sshll.u32 [#allocation4], 4
      %s28 = int_to_ptr.vmem [resolvable:$true] %s27
      %30 = dma.hbm_to_vmem [thread:$0]  %s1, 64, %s28, [#allocation5]
    $region9: #{qnetwork_forward.1} parent=1 // pred_fallthru
      _
    // Predicated region
    $region10: #{qnetwork_forward.1} parent=1 // pred_check
      _
    $region11: #{qnetwork_forward.1} parent=1 // pred_check_branch
      %32 = sbr.rel (0) target = $region13
    $region12: #{qnetwork_forward.1} parent=1 // pred_region
      %s34 = ssub.s32 2048, 2048
      %35 = vsyncadd [#allocation5], %s34
      %s36 = sshll.u32 [#allocation6], 4
      %s37 = int_to_ptr.vmem [resolvable:$true] %s36
      %42 = dma.hbm_to_vmem [thread:$0]  %s2, 2048, %s37, [#allocation5], 64, 64, 4
    $region13: #{qnetwork_forward.1} parent=1 // pred_fallthru
      _
    // Predicated region
    $region14: #{qnetwork_forward.1} parent=1 // pred_check
      _
    $region15: #{qnetwork_forward.1} parent=1 // pred_check_branch
      %44 = sbr.rel (0) target = $region17
    $region16: #{qnetwork_forward.1} parent=1 // pred_region
      _
    $region17: #{qnetwork_forward.1} parent=1 // pred_fallthru
      _
    // Predicated region
    $region18: #{qnetwork_forward.1} parent=1 // pred_check
      _
    $region19: #{qnetwork_forward.1} parent=1 // pred_check_branch
      %46 = sbr.rel (0) target = $region21
    $region20: #{qnetwork_forward.1} parent=1 // pred_region
      %47 = dma.done [#allocation3], 128
    $region21: #{qnetwork_forward.1} parent=1 // pred_fallthru
      _
    // Predicated region
    $region22: #{qnetwork_forward.1} parent=1 // pred_check
      _
    $region23: #{qnetwork_forward.1} parent=1 // pred_check_branch
      %49 = sbr.rel (0) target = $region25
    $region24: #{qnetwork_forward.1} parent=1 // pred_region
      %50 = dma.done [#allocation5], 64
    $region25: #{qnetwork_forward.1} parent=1 // pred_fallthru
      _
    // Predicated region
    $region26: #{qnetwork_forward.1} parent=1 // pred_check
      _
    $region27: #{qnetwork_forward.1} parent=1 // pred_check_branch
      %52 = sbr.rel (0) target = $region29
    $region28: #{qnetwork_forward.1} parent=1 // pred_region
      %53 = dma.done [#allocation5], 2048
    $region29: #{qnetwork_forward.1} parent=1 // pred_fallthru
      _
    %v55 = vld [vmem:[#allocation2] sm:$0xff]
    %v56 = vcvt.f32.s32.to.zero.pseudo %v55
    %v57 = vcvt.s32.f32 %v56
    %59 = vrot.lane.b32.xlu0 %v57, 124
    %v60 = vpop.permute.xlu0 %59
    %v62 = vsub.f32 %v57, %v60
    %v63 = vmul.f32 %v62, %v62
    %65 = vrot.lane.b32.xlu0 %v63, 127
    %v66 = vpop.permute.xlu0 %65
    %v68 = vadd.f32 %v63, %v66
    %69 = vrot.lane.b32.xlu0 %v57, 126
    %v70 = vpop.permute.xlu0 %69
    %v72 = vsub.f32 %v57, %v70
    %v73 = vmul.f32 %v72, %v72
    %75 = vrot.lane.b32.xlu0 %v73, 127
    %v76 = vpop.permute.xlu0 %75
    %v78 = vadd.f32 %v73, %v76
    %80 = vrot.lane.b32.xlu0 %v78, 126
    %v81 = vpop.permute.xlu0 %80
    %vm83 = vcmp.le.f32.partialorder %v68, %v81
    %v84 = vsel %vm83, %v57, %v70
    %85 = vrot.lane.b32.xlu0 %v57, 127
    %v86 = vpop.permute.xlu0 %85
    %88 = vrot.lane.b32.xlu0 %v57, 125
    %v89 = vpop.permute.xlu0 %88
    %v91 = vsel %vm83, %v86, %v89
    %v92 = vlaneseq
    %v93 = vand.u32 %v92, 127
    %vm94 = vcmp.eq.s32.totalorder %v93, 0
    %vm95 = vcmp.eq.s32.totalorder %v93, 1
    %vm96 = vcmp.eq.s32.totalorder %v93, 2
    %vm97 = vcmp.eq.s32.totalorder %v93, 3
    %98 = vset.pattern.permute.xlu0 5
    %99 = vperm.xlu0 %98, %v57
    %v100 = vpop.permute.xlu0 %99
    %v102 = vsel %vm97, %v100, 0.0
    %103 = vset.pattern.permute.xlu0 4
    %104 = vperm.xlu0 %103, %v57
    %v105 = vpop.permute.xlu0 %104
    %v107 = vsel %vm96, %v105, %v102
    %109 = vset.pattern.permute.xlu0 0
    %110 = vperm.xlu0 %109, %v91
    %v111 = vpop.permute.xlu0 %110
    %v113 = vsel %vm95, %v111, %v107
    %115 = vset.pattern.permute.xlu0 0
    %116 = vperm.xlu0 %115, %v84
    %v117 = vpop.permute.xlu0 %116
    %v119 = vsel %vm94, %v117, %v113
    %v120 = vpack.c.bf16 %v119, %v119
    %v121 = vld [vmem:[#allocation4] sm:$0xf]
    %v122 = vld [vmem:[%s3] sm:$0x1]
    %v123 = vlaneseq
    %v124 = vshrl.u32 %v123, 7
    %v125 = vsub.s32 0, %v124
    %v126 = vrot.slane %v122, %v125
    %vm127 = vcmask 64512
    %v129 = vsel %vm127, %v120, 0
    %vm131 = vcmask 1043456
    %v133 = vsel %vm131, %v121, 0
    %135 = vmatprep.subr.bf16.mxu0 0
    %136 = vmatpush1.bf16.msra.mxu0 %v133
    %137 = vmatprep.subr.bf16.mxu0 0
    %138 = vmatpush1.bf16.msra.mxu0 0
    %139 = vmatprep.subr.bf16.mxu0 0
    %140 = vmatpush1.bf16.msra.mxu0 0
    %141 = vmatprep.subr.bf16.mxu0 0
    %142 = vmatpush1.bf16.msra.mxu0 0
    %143 = vmatprep.subr.bf16.mxu0 0
    %144 = vmatpush1.bf16.msra.mxu0 0
    %145 = vmatprep.subr.bf16.mxu0 0
    %146 = vmatpush1.bf16.msra.mxu0 0
    %147 = vmatprep.subr.bf16.mxu0 0
    %148 = vmatpush1.bf16.msra.mxu0 0
    %149 = vmatprep.subr.bf16.mxu0 0
    %150 = vmatpush1.bf16.msra.mxu0 0
    %151 = vmatprep.subr.bf16.mxu0 0
    %152 = vmatpush1.bf16.msra.mxu0 0
    %153 = vmatprep.subr.bf16.mxu0 0
    %154 = vmatpush1.bf16.msra.mxu0 0
    %155 = vmatprep.subr.bf16.mxu0 0
    %156 = vmatpush1.bf16.msra.mxu0 0
    %157 = vmatprep.subr.bf16.mxu0 0
    %158 = vmatpush1.bf16.msra.mxu0 0
    %159 = vmatprep.subr.bf16.mxu0 0
    %160 = vmatpush1.bf16.msra.mxu0 0
    %161 = vmatprep.subr.bf16.mxu0 0
    %162 = vmatpush1.bf16.msra.mxu0 0
    %163 = vmatprep.subr.bf16.mxu0 0
    %164 = vmatpush1.bf16.msra.mxu0 0
    %165 = vmatprep.subr.bf16.mxu0 0
    %166 = vmatpush1.bf16.msra.mxu0 0
    %167 = vmatprep.mubr.bf16.mxu0 0
    %168 = vmatmul.mubr.bf16.gmra.mrb[0].mxu0 %v129
    %v169 = vpop.f32.mrb[0].mxu0
    %v170 = vadd.f32 %v126, %v169
    %v171 = vpop.f32.mrb[0].mxu0
    %v172 = vpop.f32.mrb[0].mxu0
    %v173 = vpop.f32.mrb[0].mxu0
    %174 = vdwg.mxu0
    %v175 = vmax.f32 %v170, 0.0
    %v176 = vpack.c.bf16 %v175, %v175
    %v177 = vld [vmem:[#allocation6] sm:$0xf]
    %v178 = vld [vmem:[#allocation6 + $0x4] sm:$0xf]
    %v179 = vld [vmem:[#allocation6 + $0x8] sm:$0xf]
    %v180 = vld [vmem:[#allocation6 + $0xc] sm:$0xf]
    %v181 = vld [vmem:[#allocation6 + $0x10] sm:$0xf]
    %v182 = vld [vmem:[#allocation6 + $0x14] sm:$0xf]
    %v183 = vld [vmem:[#allocation6 + $0x18] sm:$0xf]
    %v184 = vld [vmem:[#allocation6 + $0x1c] sm:$0xf]
    %v185 = vld [vmem:[#allocation6 + $0x20] sm:$0xf]
    %v186 = vld [vmem:[#allocation6 + $0x24] sm:$0xf]
    %v187 = vld [vmem:[#allocation6 + $0x28] sm:$0xf]
    %v188 = vld [vmem:[#allocation6 + $0x2c] sm:$0xf]
    %v189 = vld [vmem:[#allocation6 + $0x30] sm:$0xf]
    %v190 = vld [vmem:[#allocation6 + $0x34] sm:$0xf]
    %v191 = vld [vmem:[#allocation6 + $0x38] sm:$0xf]
    %v192 = vld [vmem:[#allocation6 + $0x3c] sm:$0xf]
    %v193 = vld [vmem:[%s3 + $0x1] sm:$0x1]
    %v194 = vlaneseq
    %v195 = vshrl.u32 %v194, 7
    %v196 = vsub.s32 0, %v195
    %v197 = vrot.slane %v193, %v196
    %v214 = vunpack.c.l.b16 %v177
    %v215 = vunpack.c.l.b16 %v178
    %v216 = vunpack.c.l.b16 %v179
    %v217 = vunpack.c.l.b16 %v180
    %v218 = vunpack.c.l.b16 %v181
    %v219 = vunpack.c.l.b16 %v182
    %v220 = vunpack.c.l.b16 %v183
    %v221 = vunpack.c.l.b16 %v184
    %v222 = vunpack.c.l.b16 %v185
    %v223 = vunpack.c.l.b16 %v186
    %v224 = vunpack.c.l.b16 %v187
    %v225 = vunpack.c.l.b16 %v188
    %v226 = vunpack.c.l.b16 %v189
    %v227 = vunpack.c.l.b16 %v190
    %v228 = vunpack.c.l.b16 %v191
    %v229 = vunpack.c.l.b16 %v192
    %v230 = vpack.c.b16 %v215, %v214
    %v231 = vpack.c.b16 %v217, %v216
    %v232 = vpack.c.b16 %v219, %v218
    %v233 = vpack.c.b16 %v221, %v220
    %v234 = vpack.c.b16 %v223, %v222
    %v235 = vpack.c.b16 %v225, %v224
    %v236 = vpack.c.b16 %v227, %v226
    %v237 = vpack.c.b16 %v229, %v228
    %246 = vmatprep.subr.bf16.mxu0 0
    %247 = vmatpush1.bf16.msra.mxu0 %v230
    %248 = vmatprep.subr.bf16.mxu0 0
    %249 = vmatpush1.bf16.msra.mxu0 %v231
    %250 = vmatprep.subr.bf16.mxu0 0
    %251 = vmatpush1.bf16.msra.mxu0 %v232
    %252 = vmatprep.subr.bf16.mxu0 0
    %253 = vmatpush1.bf16.msra.mxu0 %v233
    %254 = vmatprep.subr.bf16.mxu0 0
    %255 = vmatpush1.bf16.msra.mxu0 %v234
    %256 = vmatprep.subr.bf16.mxu0 0
    %257 = vmatpush1.bf16.msra.mxu0 %v235
    %258 = vmatprep.subr.bf16.mxu0 0
    %259 = vmatpush1.bf16.msra.mxu0 %v236
    %260 = vmatprep.subr.bf16.mxu0 0
    %261 = vmatpush1.bf16.msra.mxu0 %v237
    %262 = vmatprep.subr.bf16.mxu0 0
    %263 = vmatpush1.bf16.msra.mxu0 0
    %264 = vmatprep.subr.bf16.mxu0 0
    %265 = vmatpush1.bf16.msra.mxu0 0
    %266 = vmatprep.subr.bf16.mxu0 0
    %267 = vmatpush1.bf16.msra.mxu0 0
    %268 = vmatprep.subr.bf16.mxu0 0
    %269 = vmatpush1.bf16.msra.mxu0 0
    %270 = vmatprep.subr.bf16.mxu0 0
    %271 = vmatpush1.bf16.msra.mxu0 0
    %272 = vmatprep.subr.bf16.mxu0 0
    %273 = vmatpush1.bf16.msra.mxu0 0
    %274 = vmatprep.subr.bf16.mxu0 0
    %275 = vmatpush1.bf16.msra.mxu0 0
    %276 = vmatprep.subr.bf16.mxu0 0
    %277 = vmatpush1.bf16.msra.mxu0 0
    %278 = vmatprep.mubr.bf16.mxu0 0
    %279 = vmatmul.mubr.bf16.gmra.mrb[0].mxu0 %v176
    %v280 = vpop.f32.mrb[0].mxu0
    %v281 = vadd.f32 %v197, %v280
    %v282 = vpop.f32.mrb[0].mxu0
    %v283 = vpop.f32.mrb[0].mxu0
    %v284 = vpop.f32.mrb[0].mxu0
    %285 = vdwg.mxu0
    %v286 = vmax.f32 %v281, 0.0
    %v287 = vpack.c.bf16 %v286, %v286
    %s288 = scalar_lea.vmem [#allocation6], 64
    %v289 = vld [vmem:[%s288] sm:$0xf]
    %v290 = vld [vmem:[%s288 + $0x4] sm:$0xf]
    %v291 = vld [vmem:[%s288 + $0x8] sm:$0xf]
    %v292 = vld [vmem:[%s288 + $0xc] sm:$0xf]
    %v293 = vld [vmem:[%s288 + $0x10] sm:$0xf]
    %v294 = vld [vmem:[%s288 + $0x14] sm:$0xf]
    %v295 = vld [vmem:[%s288 + $0x18] sm:$0xf]
    %v296 = vld [vmem:[%s288 + $0x1c] sm:$0xf]
    %v297 = vld [vmem:[%s288 + $0x20] sm:$0xf]
    %v298 = vld [vmem:[%s288 + $0x24] sm:$0xf]
    %v299 = vld [vmem:[%s288 + $0x28] sm:$0xf]
    %v300 = vld [vmem:[%s288 + $0x2c] sm:$0xf]
    %v301 = vld [vmem:[%s288 + $0x30] sm:$0xf]
    %v302 = vld [vmem:[%s288 + $0x34] sm:$0xf]
    %v303 = vld [vmem:[%s288 + $0x38] sm:$0xf]
    %v304 = vld [vmem:[%s288 + $0x3c] sm:$0xf]
    %v305 = vld [vmem:[%s3 + $0x2] sm:$0x1]
    %v306 = vlaneseq
    %v307 = vshrl.u32 %v306, 7
    %v308 = vsub.s32 0, %v307
    %v309 = vrot.slane %v305, %v308
    %v326 = vunpack.c.l.b16 %v289
    %v327 = vunpack.c.l.b16 %v290
    %v328 = vunpack.c.l.b16 %v291
    %v329 = vunpack.c.l.b16 %v292
    %v330 = vunpack.c.l.b16 %v293
    %v331 = vunpack.c.l.b16 %v294
    %v332 = vunpack.c.l.b16 %v295
    %v333 = vunpack.c.l.b16 %v296
    %v334 = vunpack.c.l.b16 %v297
    %v335 = vunpack.c.l.b16 %v298
    %v336 = vunpack.c.l.b16 %v299
    %v337 = vunpack.c.l.b16 %v300
    %v338 = vunpack.c.l.b16 %v301
    %v339 = vunpack.c.l.b16 %v302
    %v340 = vunpack.c.l.b16 %v303
    %v341 = vunpack.c.l.b16 %v304
    %v342 = vpack.c.b16 %v327, %v326
    %v343 = vpack.c.b16 %v329, %v328
    %v344 = vpack.c.b16 %v331, %v330
    %v345 = vpack.c.b16 %v333, %v332
    %v346 = vpack.c.b16 %v335, %v334
    %v347 = vpack.c.b16 %v337, %v336
    %v348 = vpack.c.b16 %v339, %v338
    %v349 = vpack.c.b16 %v341, %v340
    %358 = vmatprep.subr.bf16.mxu0 0
    %359 = vmatpush1.bf16.msra.mxu0 %v342
    %360 = vmatprep.subr.bf16.mxu0 0
    %361 = vmatpush1.bf16.msra.mxu0 %v343
    %362 = vmatprep.subr.bf16.mxu0 0
    %363 = vmatpush1.bf16.msra.mxu0 %v344
    %364 = vmatprep.subr.bf16.mxu0 0
    %365 = vmatpush1.bf16.msra.mxu0 %v345
    %366 = vmatprep.subr.bf16.mxu0 0
    %367 = vmatpush1.bf16.msra.mxu0 %v346
    %368 = vmatprep.subr.bf16.mxu0 0
    %369 = vmatpush1.bf16.msra.mxu0 %v347
    %370 = vmatprep.subr.bf16.mxu0 0
    %371 = vmatpush1.bf16.msra.mxu0 %v348
    %372 = vmatprep.subr.bf16.mxu0 0
    %373 = vmatpush1.bf16.msra.mxu0 %v349
    %374 = vmatprep.subr.bf16.mxu0 0
    %375 = vmatpush1.bf16.msra.mxu0 0
    %376 = vmatprep.subr.bf16.mxu0 0
    %377 = vmatpush1.bf16.msra.mxu0 0
    %378 = vmatprep.subr.bf16.mxu0 0
    %379 = vmatpush1.bf16.msra.mxu0 0
    %380 = vmatprep.subr.bf16.mxu0 0
    %381 = vmatpush1.bf16.msra.mxu0 0
    %382 = vmatprep.subr.bf16.mxu0 0
    %383 = vmatpush1.bf16.msra.mxu0 0
    %384 = vmatprep.subr.bf16.mxu0 0
    %385 = vmatpush1.bf16.msra.mxu0 0
    %386 = vmatprep.subr.bf16.mxu0 0
    %387 = vmatpush1.bf16.msra.mxu0 0
    %388 = vmatprep.subr.bf16.mxu0 0
    %389 = vmatpush1.bf16.msra.mxu0 0
    %390 = vmatprep.mubr.bf16.mxu0 0
    %391 = vmatmul.mubr.bf16.gmra.mrb[0].mxu0 %v287
    %v392 = vpop.f32.mrb[0].mxu0
    %v393 = vadd.f32 %v309, %v392
    %v394 = vpop.f32.mrb[0].mxu0
    %v395 = vpop.f32.mrb[0].mxu0
    %v396 = vpop.f32.mrb[0].mxu0
    %397 = vdwg.mxu0
    %398 = vst.msk [vmem:[%s4] sm:$0xff] %vm127, %v393
    // Predicated region
    $region30: #{qnetwork_forward.1} parent=1 // pred_check
      _
    $region31: #{qnetwork_forward.1} parent=1 // pred_check_branch
      %400 = sbr.rel (0) target = $region33
    $region32: #{qnetwork_forward.1} parent=1 // pred_region
      _
    $region33: #{qnetwork_forward.1} parent=1 // pred_fallthru
      _
    // Predicated region
    $region34: #{qnetwork_forward.1} parent=1 // pred_check
      _
    $region35: #{qnetwork_forward.1} parent=1 // pred_check_branch
      %402 = sbr.rel (0) target = $region37
    $region36: #{qnetwork_forward.1} parent=1 // pred_region
      _
    $region37: #{qnetwork_forward.1} parent=1 // pred_fallthru
      _
    %403 = vsyncpa [#allocation3], 1
    %404 = vsyncpa [#allocation5], 1

</llo_original>
